<compile_context>
chip_gen: v6e
topology: v6e:2x2x1
jax: 0.10.0
libtpu: 0.0.40
codegen_flags: <defaults>
</compile_context>

<pallas_src>
import functools

import jax
import jax.numpy as jnp
from jax.experimental import pallas as pl
from jax.experimental.pallas import tpu as pltpu


# ---------------------------------------------------------------------------
# Kernels (run once per grid step on a (TILE_R, LANES) VMEM tile)
# ---------------------------------------------------------------------------

def _grad_kernel(x_ref, z_ref, o_ref, *, lam):
    # grad = lambda * (x - z), elementwise
    o_ref[...] = lam * (x_ref[...] - z_ref[...])


def _prox_kernel(x_ref, z_ref, o_ref, *, tl, inv):
    # prox = (x + tau*lambda*z) / (1 + tau*lambda); inv precomputed host-side
    o_ref[...] = (x_ref[...] + tl * z_ref[...]) * inv


def _energy_kernel(x_ref, z_ref, o_ref, acc_ref, *, half_lam):
    # Streaming reduction: energy = lambda/2 * sum((x - z)^2), f32 accumulation.
    @pl.when(pl.program_id(0) == 0)
    def _():
        acc_ref[...] = jnp.zeros_like(acc_ref)

    d = (x_ref[...] - z_ref[...]).astype(jnp.float32)
    acc_ref[...] += jnp.sum(d * d, axis=0, keepdims=True)  # (1, LANES) partial

    @pl.when(pl.program_id(0) == pl.num_programs(0) - 1)
    def _():
        o_ref[0, 0] = half_lam * jnp.sum(acc_ref[...])


# ---------------------------------------------------------------------------
# Tiling helpers (wrapper-side layout plumbing only)
# ---------------------------------------------------------------------------

_LANES_BIG = 512        # lane-dense width for large tensors (multiple of 128)
_LANES_SMALL = 128      # minimum lane width
_MAX_TILE_ROWS = 512    # 512 x 512 f32 tile = 1 MiB


def _round_up(a, b):
    return ((a + b - 1) // b) * b


def _tiling_for(n):
    """Pick (lanes, tile_rows, grid_rows, padded_rows) for n elements."""
    lanes = _LANES_BIG if n >= _LANES_BIG * _MAX_TILE_ROWS else _LANES_SMALL
    rows = pl.cdiv(n, lanes)
    tile_r = min(_MAX_TILE_ROWS, _round_up(rows, 8))   # (8,128)-aligned block
    grid_rows = pl.cdiv(rows, tile_r)
    padded_rows = grid_rows * tile_r
    return lanes, tile_r, grid_rows, padded_rows


def _to_tiles(arr, padded_rows, lanes):
    """Flatten to 1-D, zero-pad to padded_rows*lanes, reshape lane-dense."""
    n = arr.size
    flat = arr.reshape(-1)
    total = padded_rows * lanes
    if total != n:
        flat = jnp.pad(flat, (0, total - n))
    return flat.reshape(padded_rows, lanes)


# ---------------------------------------------------------------------------
# Wrapper
# ---------------------------------------------------------------------------

class DatatermPallas:
    """L2 dataterm D(x) = lambda/2 * ||x - z||^2 with Pallas TPU kernels."""

    def __init__(self, lam: float = 0.1):
        self.lam = float(lam)   # compile-time constant; baked into kernels

    def _elementwise_call(self, kernel_fn, x, z):
        shape = x.shape
        n = x.size
        lanes, tile_r, grid_rows, padded_rows = _tiling_for(n)
        x2 = _to_tiles(x, padded_rows, lanes)
        z2 = _to_tiles(z, padded_rows, lanes)

        out = pl.pallas_call(
            kernel_fn,
            out_shape=jax.ShapeDtypeStruct((padded_rows, lanes), x.dtype),
            grid_spec=pltpu.PrefetchScalarGridSpec(
                num_scalar_prefetch=0,
                grid=(grid_rows,),
                in_specs=[
                    pl.BlockSpec((tile_r, lanes), lambda i: (i, 0)),
                    pl.BlockSpec((tile_r, lanes), lambda i: (i, 0)),
                ],
                out_specs=pl.BlockSpec((tile_r, lanes), lambda i: (i, 0)),
            ),
            # Independent row tiles -> shard across both TensorCores on v7x.
            compiler_params=pltpu.CompilerParams(
                dimension_semantics=("parallel",)),
        )(x2, z2)
        return out.reshape(-1)[:n].reshape(shape)

    # forward is abstract in the base class; the concrete L2 dataterm's forward
    # is its gradient step contribution.
    def forward(self, x, z):
        return self.grad(x, z)

    def grad(self, x, z):
        kernel_fn = functools.partial(_grad_kernel, lam=self.lam)
        return self._elementwise_call(kernel_fn, x, z)

    def prox(self, x, z, tau: float = 1.0):
        tl = float(tau) * self.lam
        kernel_fn = functools.partial(_prox_kernel, tl=tl, inv=1.0 / (1.0 + tl))
        return self._elementwise_call(kernel_fn, x, z)

    def energy(self, x, z):
        n = x.size
        lanes, tile_r, grid_rows, padded_rows = _tiling_for(n)
        x2 = _to_tiles(x, padded_rows, lanes)   # zero padding contributes 0
        z2 = _to_tiles(z, padded_rows, lanes)

        out = pl.pallas_call(
            functools.partial(_energy_kernel, half_lam=0.5 * self.lam),
            out_shape=jax.ShapeDtypeStruct((1, 1), jnp.float32),
            grid_spec=pltpu.PrefetchScalarGridSpec(
                num_scalar_prefetch=0,
                grid=(grid_rows,),
                in_specs=[
                    pl.BlockSpec((tile_r, lanes), lambda i: (i, 0)),
                    pl.BlockSpec((tile_r, lanes), lambda i: (i, 0)),
                ],
                out_specs=pl.BlockSpec((1, 1), lambda i: (0, 0)),
                scratch_shapes=[pltpu.VMEM((1, lanes), jnp.float32)],
            ),
            # Reduction axis: output block resident across the whole grid.
            compiler_params=pltpu.CompilerParams(
                dimension_semantics=("arbitrary",)),
        )(x2, z2)
        return out[0, 0]


# ---------------------------------------------------------------------------
# Demo / correctness check
# ---------------------------------------------------------------------------

if __name__ == "__main__":
    key = jax.random.PRNGKey(0)
    kx, kz, kx2, kz2 = jax.random.split(key, 4)

    lam = 0.1
    dt = DatatermPallas(lam=lam)

    # Small NCHW shape, lane-aligned (H*W multiple of 128).
    B, C, H, W = 2, 4, 16, 16
    x = jax.random.normal(kx, (B, C, H, W), dtype=jnp.float32)
    z = jax.random.normal(kz, (B, C, H, W), dtype=jnp.float32)

    g = jax.block_until_ready(dt.grad(x, z))
    p = jax.block_until_ready(dt.prox(x, z, tau=1.0))
    e = jax.block_until_ready(dt.energy(x, z))
    f = jax.block_until_ready(dt.forward(x, z))

    g_ref = lam * (x - z)
    p_ref = (x + lam * z) / (1.0 + lam)
    e_ref = 0.5 * lam * jnp.sum((x - z) ** 2)

    assert g.shape == (B, C, H, W) and g.dtype == jnp.float32
    assert jnp.allclose(g, g_ref, atol=1e-5)
    assert jnp.allclose(p, p_ref, atol=1e-5)
    assert jnp.allclose(e, e_ref, rtol=1e-4, atol=1e-4)
    assert jnp.allclose(f, g_ref, atol=1e-5)

    # Non-aligned spatial size: exercises the zero-padded ragged tail path.
    B2, C2, H2, W2 = 1, 3, 25, 25
    xr = jax.random.normal(kx2, (B2, C2, H2, W2), dtype=jnp.float32)
    zr = jax.random.normal(kz2, (B2, C2, H2, W2), dtype=jnp.float32)

    gr = jax.block_until_ready(dt.grad(xr, zr))
    pr = jax.block_until_ready(dt.prox(xr, zr, tau=0.5))
    er = jax.block_until_ready(dt.energy(xr, zr))

    gr_ref = lam * (xr - zr)
    pr_ref = (xr + 0.5 * lam * zr) / (1.0 + 0.5 * lam)
    er_ref = 0.5 * lam * jnp.sum((xr - zr) ** 2)

    assert gr.shape == (B2, C2, H2, W2)
    assert jnp.allclose(gr, gr_ref, atol=1e-5)
    assert jnp.allclose(pr, pr_ref, atol=1e-5)
    assert jnp.allclose(er, er_ref, rtol=1e-4, atol=1e-4)

    print("KERNEL_OK")
</pallas_src>

<mosaic_0001>
module attributes {stable_mosaic.version = 11 : i64} {
  func.func @_grad_kernel(%arg0: i32, %arg1: memref<16x128xf32, #tpu.memory_space<vmem>>, %arg2: memref<16x128xf32, #tpu.memory_space<vmem>>, %arg3: memref<16x128xf32, #tpu.memory_space<vmem>>) attributes {dimension_semantics = [#tpu.dimension_semantics<parallel>], iteration_bounds = array<i64: 1>, scalar_prefetch = 0 : i64, scratch_operands = 0 : i64, tpu.core_type = #tpu.core_type<tc>, window_params = [{transform_indices = @transform_0, window_bounds = array<i64: 16, 128>}, {transform_indices = @transform_1, window_bounds = array<i64: 16, 128>}, {transform_indices = @transform_2, window_bounds = array<i64: 16, 128>}]} {
    %c0 = arith.constant 0 : index
    %c0_0 = arith.constant 0 : index
    %0 = vector.load %arg1[%c0, %c0_0] : memref<16x128xf32, #tpu.memory_space<vmem>>, vector<16x128xf32>
    %c0_1 = arith.constant 0 : index
    %c0_2 = arith.constant 0 : index
    %1 = vector.load %arg2[%c0_1, %c0_2] : memref<16x128xf32, #tpu.memory_space<vmem>>, vector<16x128xf32>
    %2 = arith.subf %0, %1 : vector<16x128xf32>
    %cst = arith.constant 1.000000e-01 : f32
    %3 = vector.broadcast %cst : f32 to vector<16x128xf32>
    %4 = arith.mulf %3, %2 : vector<16x128xf32>
    %c0_3 = arith.constant 0 : index
    %c0_4 = arith.constant 0 : index
    %5 = vector.load %arg3[%c0_3, %c0_4] : memref<16x128xf32, #tpu.memory_space<vmem>>, vector<16x128xf32>
    tpu.vector_store %arg3[%c0_3, %c0_4], %4 {strides = array<i32>} : memref<16x128xf32, #tpu.memory_space<vmem>>, vector<16x128xf32>,
    return
  }
  func.func @transform_0(%arg0: i32) -> (i32, i32) {
    %c0_i32 = arith.constant 0 : i32
    %c0_i32_0 = arith.constant 0 : i32
    return %arg0, %c0_i32 : i32, i32
  }
  func.func @transform_1(%arg0: i32) -> (i32, i32) {
    %c0_i32 = arith.constant 0 : i32
    %c0_i32_0 = arith.constant 0 : i32
    return %arg0, %c0_i32 : i32, i32
  }
  func.func @transform_2(%arg0: i32) -> (i32, i32) {
    %c0_i32 = arith.constant 0 : i32
    %c0_i32_0 = arith.constant 0 : i32
    return %arg0, %c0_i32 : i32, i32
  }
}

</mosaic_0001>

<llo_original>
// kernel: tpu_custom_call.1
$region0: #{tpu_custom_call.1}
  #allocation0 [shape = 'u32[]', space=smem, size = 0x4, offset = 0x4, fixed_abs, tag = 'smem constant byte address 0x4 - core index']
  #allocation1 [shape = 'u32[144,128]{1,0:T(1,128)}', space=vmem, size = 0x12000, scoped, tag = 'internal scratch']
  %s0 = inlined_call_operand.hbm [shape: f32[16,128], index: 0, kind: input, shape index: {}]
  %s1 = inlined_call_operand.hbm [shape: f32[16,128], index: 1, kind: input, shape index: {}]
  %s2 = inlined_call_operand.hbm [shape: f32[16,128], index: 2, kind: output, shape index: {}]
  %s3 = sld [smem:[#allocation0]]
  $region26: #{tpu_custom_call.1} parent=0
    _
  %s5 = ssub.s32 1, %s3
  %s6 = scalar_select 0, %s5, %s3
  $region1: #{tpu_custom_call.1} parent=0
    #allocation2 [shape = 'u8[8192]{0}', space=vmem, size = 0x2000, scoped, tag = 'input window, operand 0, single buffered']
    #allocation3 [shape = 's32[1]{0}', space=sflag, size = 0x4, scoped, tag = 'scoped memory for tpu_custom_call.1']
    #allocation4 [shape = 's32[1]{0}', space=sflag, size = 0x4, scoped, tag = 'scoped memory for tpu_custom_call.1']
    #allocation5 [shape = 'u8[8192]{0}', space=vmem, size = 0x2000, scoped, tag = 'input window, operand 1, single buffered']
    #allocation6 [shape = 's32[1]{0}', space=sflag, size = 0x4, scoped, tag = 'scoped memory for tpu_custom_call.1']
    #allocation7 [shape = 'u8[8192]{0}', space=vmem, size = 0x2000, scoped, tag = 'output window, operand 0, single buffered']
    %7 = vsyncpa [#allocation3], 0
    %8 = vsyncpa [#allocation6], 0
    %9 = vsyncpa [#allocation4], 0
    // Predicated region
    $region2: #{tpu_custom_call.1} parent=1 // pred_check
      _
    $region3: #{tpu_custom_call.1} parent=1 // pred_check_branch
      %11 = sbr.rel (0) target = $region5
    $region4: #{tpu_custom_call.1} parent=1 // pred_region
      %s13 = ssub.s32 256, 256
      %14 = vsyncadd [#allocation3], %s13
      %s15 = sshll.u32 [#allocation2], 4
      %s16 = int_to_ptr.vmem [resolvable:$true] %s15
      %21 = dma.hbm_to_vmem [thread:$0]  %s0, 256, %s16, [#allocation3], 128, 128, 8
    $region5: #{tpu_custom_call.1} parent=1 // pred_fallthru
      _
    // Predicated region
    $region6: #{tpu_custom_call.1} parent=1 // pred_check
      _
    $region7: #{tpu_custom_call.1} parent=1 // pred_check_branch
      %23 = sbr.rel (0) target = $region9
    $region8: #{tpu_custom_call.1} parent=1 // pred_region
      %s25 = ssub.s32 256, 256
      %26 = vsyncadd [#allocation6], %s25
      %s27 = sshll.u32 [#allocation5], 4
      %s28 = int_to_ptr.vmem [resolvable:$true] %s27
      %33 = dma.hbm_to_vmem [thread:$0]  %s1, 256, %s28, [#allocation6], 128, 128, 8
    $region9: #{tpu_custom_call.1} parent=1 // pred_fallthru
      _
    // Predicated region
    $region10: #{tpu_custom_call.1} parent=1 // pred_check
      _
    $region11: #{tpu_custom_call.1} parent=1 // pred_check_branch
      %35 = sbr.rel (0) target = $region13
    $region12: #{tpu_custom_call.1} parent=1 // pred_region
      %36 = dma.done [#allocation3], 256
    $region13: #{tpu_custom_call.1} parent=1 // pred_fallthru
      _
    // Predicated region
    $region14: #{tpu_custom_call.1} parent=1 // pred_check
      _
    $region15: #{tpu_custom_call.1} parent=1 // pred_check_branch
      %38 = sbr.rel (0) target = $region17
    $region16: #{tpu_custom_call.1} parent=1 // pred_region
      %39 = dma.done [#allocation6], 256
    $region17: #{tpu_custom_call.1} parent=1 // pred_fallthru
      _
    %v40 = vld [vmem:[#allocation2] sm:$0xff]
    %v41 = vld [vmem:[#allocation2 + $0x8] sm:$0xff]
    %v42 = vld [vmem:[#allocation5] sm:$0xff]
    %v43 = vld [vmem:[#allocation5 + $0x8] sm:$0xff]
    %v44 = vsub.f32 %v40, %v42
    %v45 = vsub.f32 %v41, %v43
    %v46 = vmul.f32 %v44, 0.1
    %v47 = vmul.f32 %v45, 0.1
    %48 = vst [vmem:[#allocation7] sm:$0xff] %v46
    %49 = vst [vmem:[#allocation7 + $0x8] sm:$0xff] %v47
    // Predicated region
    $region18: #{tpu_custom_call.1} parent=1 // pred_check
      _
    $region19: #{tpu_custom_call.1} parent=1 // pred_check_branch
      %51 = sbr.rel (0) target = $region21
    $region20: #{tpu_custom_call.1} parent=1 // pred_region
      %s53 = ssub.s32 256, 256
      %54 = vsyncadd [#allocation4], %s53
      %s55 = sshll.u32 [#allocation7], 4
      %s56 = int_to_ptr.vmem [resolvable:$true] %s55
      %61 = dma.vmem_to_hbm [thread:$0]  %s56, 256, %s2, [#allocation4], 128, 128, 8
    $region21: #{tpu_custom_call.1} parent=1 // pred_fallthru
      _
    // Predicated region
    $region22: #{tpu_custom_call.1} parent=1 // pred_check
      _
    $region23: #{tpu_custom_call.1} parent=1 // pred_check_branch
      %63 = sbr.rel (0) target = $region25
    $region24: #{tpu_custom_call.1} parent=1 // pred_region
      %64 = dma.done [#allocation4], 256
    $region25: #{tpu_custom_call.1} parent=1 // pred_fallthru
      _
    %65 = vsyncpa [#allocation3], 1
    %66 = vsyncpa [#allocation6], 1
    %67 = vsyncpa [#allocation4], 1

</llo_original>
